<compile_context>
chip_gen: v7x
topology: tpu7x:2x2x1
jax: 0.10.0
libtpu: 0.0.40
codegen_flags: <defaults>
</compile_context>

<pallas_src>
import functools

import jax
import jax.numpy as jnp
from jax import lax
from jax.experimental import pallas as pl
from jax.experimental.pallas import tpu as pltpu


def _lstm_classifier_kernel(x_ref, wih_ref, whh_ref, b_ref, wtag_ref, btag_ref,
                            out_ref, xg_scr, *, hidden_dim):
    H = hidden_dim
    seq_len = x_ref.shape[0]

    # ---- Prologue: hoisted input projection for ALL timesteps at once. ----
    # (seq_len, E) @ (E, 4H) -> (seq_len, 4H), bias fused in.
    xg_scr[...] = (
        jnp.dot(x_ref[...], wih_ref[...], preferred_element_type=jnp.float32)
        + b_ref[...]
    )

    # Lane mask for the g-gate (its W/b columns were pre-scaled by 2 in the
    # wrapper, so tanh(x) = 2*sigmoid(2x) - 1 is recovered on those lanes).
    lane = lax.broadcasted_iota(jnp.int32, (1, 4 * H), 1)
    g_mask = (lane >= 2 * H) & (lane < 3 * H)

    def step(t, carry):
        h, c = carry                                   # (1, H) f32 each
        gates = xg_scr[pl.ds(t, 1), :] + jnp.dot(
            h.astype(whh_ref.dtype), whh_ref[...],
            preferred_element_type=jnp.float32)        # (1, 4H) f32
        # Single full-lane-width EUP pass + masked fixup for the tanh gate.
        s = jax.nn.sigmoid(gates)
        act = jnp.where(g_mask, 2.0 * s - 1.0, s)
        i_g = act[:, 0 * H:1 * H]
        f_g = act[:, 1 * H:2 * H]
        g_g = act[:, 2 * H:3 * H]
        o_g = act[:, 3 * H:4 * H]
        c_new = f_g * c + i_g * g_g
        h_new = o_g * jnp.tanh(c_new)
        return (h_new, c_new)

    h0 = jnp.zeros((1, H), jnp.float32)
    c0 = jnp.zeros((1, H), jnp.float32)
    h_fin, _ = lax.fori_loop(0, seq_len, step, (h0, c0), unroll=True)

    # ---- hidden2tag linear on final hidden state + LogSoftmax(dim=1). ----
    tag_space = (
        jnp.dot(h_fin.astype(wtag_ref.dtype), wtag_ref[...],
                preferred_element_type=jnp.float32)
        + btag_ref[...]
    )                                                  # (1, T) f32
    m = jnp.max(tag_space, axis=1, keepdims=True)
    z = tag_space - m
    lse = jnp.log(jnp.sum(jnp.exp(z), axis=1, keepdims=True))
    out_ref[...] = z - lse


def lstm_classifier_forward(x, params):
    """x: (seq_len, embedding_dim) float32 -> (1, tagset_size) float32."""
    w_ih, w_hh, b_ih, b_hh, w_tag, b_tag = (
        params["w_ih"], params["w_hh"], params["b_ih"],
        params["b_hh"], params["w_tag"], params["b_tag"],
    )
    H = w_hh.shape[1]
    T = w_tag.shape[0]
    seq_len = x.shape[0]

    # --- Weight prep in plain JAX (glue). ---
    # Scale the g-gate columns by 2 so the kernel can apply one sigmoid to the
    # whole (1, 4H) gate vector and recover tanh via 2*sigmoid(2x)-1.
    col = jnp.arange(4 * H)
    gscale = jnp.where((col >= 2 * H) & (col < 3 * H), 2.0, 1.0).astype(jnp.float32)

    wih_t = (w_ih.T * gscale[None, :]).astype(jnp.bfloat16)    # (E, 4H) bf16
    whh_t = (w_hh.T * gscale[None, :]).astype(jnp.bfloat16)    # (H, 4H) bf16
    b = ((b_ih + b_hh) * gscale).reshape(1, 4 * H)             # (1, 4H) f32
    wtag_t = w_tag.T.astype(jnp.bfloat16)                      # (H, T)  bf16
    btag = b_tag.reshape(1, T)                                 # (1, T)  f32
    x_bf16 = x.astype(jnp.bfloat16)                            # (S, E)  bf16

    kernel = functools.partial(_lstm_classifier_kernel, hidden_dim=H)
    vmem = pl.BlockSpec(memory_space=pltpu.MemorySpace.VMEM)

    return pl.pallas_call(
        kernel,
        out_shape=jax.ShapeDtypeStruct((1, T), jnp.float32),
        in_specs=[vmem] * 6,
        out_specs=vmem,
        scratch_shapes=[
            pltpu.VMEM((seq_len, 4 * H), jnp.float32),   # hoisted x-projection
        ],
        compiler_params=pltpu.CompilerParams(
            vmem_limit_bytes=32 * 1024 * 1024),
    )(x_bf16, wih_t, whh_t, b, wtag_t, btag)


def init_params(key, embedding_dim, hidden_dim, tagset_size):
    # Deterministic synthetic init (uniform(-1/sqrt(H), 1/sqrt(H)) like PyTorch).
    ks = jax.random.split(key, 6)
    s = 1.0 / jnp.sqrt(hidden_dim)
    return {
        "w_ih": jax.random.uniform(ks[0], (4 * hidden_dim, embedding_dim),
                                   jnp.float32, -s, s),
        "w_hh": jax.random.uniform(ks[1], (4 * hidden_dim, hidden_dim),
                                   jnp.float32, -s, s),
        "b_ih": jax.random.uniform(ks[2], (4 * hidden_dim,), jnp.float32, -s, s),
        "b_hh": jax.random.uniform(ks[3], (4 * hidden_dim,), jnp.float32, -s, s),
        "w_tag": jax.random.uniform(ks[4], (tagset_size, hidden_dim),
                                    jnp.float32, -s, s),
        "b_tag": jax.random.uniform(ks[5], (tagset_size,), jnp.float32, -s, s),
    }


def _reference_forward(x, params):
    """Pure-JAX f32 reference matching PyTorch LSTMClassifier.forward."""
    w_ih, w_hh = params["w_ih"], params["w_hh"]
    b = params["b_ih"] + params["b_hh"]
    H = w_hh.shape[1]
    h = jnp.zeros((1, H), jnp.float32)
    c = jnp.zeros((1, H), jnp.float32)
    for t in range(x.shape[0]):
        gates = x[t:t + 1] @ w_ih.T + h @ w_hh.T + b[None, :]
        i_g = jax.nn.sigmoid(gates[:, 0 * H:1 * H])
        f_g = jax.nn.sigmoid(gates[:, 1 * H:2 * H])
        g_g = jnp.tanh(gates[:, 2 * H:3 * H])
        o_g = jax.nn.sigmoid(gates[:, 3 * H:4 * H])
        c = f_g * c + i_g * g_g
        h = o_g * jnp.tanh(c)
    tag_space = h @ params["w_tag"].T + params["b_tag"][None, :]
    return jax.nn.log_softmax(tag_space, axis=1)


if __name__ == "__main__":
    SEQ_LEN = 8
    EMBEDDING_DIM = 16
    HIDDEN_DIM = 32
    TAGSET_SIZE = 8

    key = jax.random.PRNGKey(0)
    k_x, k_p = jax.random.split(key)

    x = jax.random.normal(k_x, (SEQ_LEN, EMBEDDING_DIM), jnp.float32)
    params = init_params(k_p, EMBEDDING_DIM, HIDDEN_DIM, TAGSET_SIZE)

    out = lstm_classifier_forward(x, params)
    out = jax.block_until_ready(out)

    assert out.shape == (1, TAGSET_SIZE)
    # log-softmax rows should (approximately) exponentiate-sum to 1
    assert jnp.allclose(jnp.sum(jnp.exp(out), axis=1), 1.0, atol=1e-4)
    # match the pure-f32 reference (loose tol: weights/x run through bf16 MXU)
    ref = _reference_forward(x, params)
    assert jnp.allclose(out, ref, atol=0.1), (out, ref)
    print("KERNEL_OK")
</pallas_src>

<mosaic_0001>
module attributes {stable_mosaic.version = 11 : i64} {
  func.func @_lstm_classifier_kernel(%arg0: memref<8x16xbf16, #tpu.memory_space<vmem>>, %arg1: memref<16x128xbf16, #tpu.memory_space<vmem>>, %arg2: memref<32x128xbf16, #tpu.memory_space<vmem>>, %arg3: memref<1x128xf32, #tpu.memory_space<vmem>>, %arg4: memref<32x8xbf16, #tpu.memory_space<vmem>>, %arg5: memref<1x8xf32, #tpu.memory_space<vmem>>, %arg6: memref<1x8xf32, #tpu.memory_space<vmem>>, %arg7: memref<8x128xf32, #tpu.memory_space<vmem>>) attributes {dimension_semantics = [], scalar_prefetch = 0 : i64, scratch_operands = 1 : i64, tpu.core_type = #tpu.core_type<tc>} {
    %c0 = arith.constant 0 : index
    %c0_0 = arith.constant 0 : index
    %0 = vector.load %arg0[%c0, %c0_0] : memref<8x16xbf16, #tpu.memory_space<vmem>>, vector<8x16xbf16>
    %c0_1 = arith.constant 0 : index
    %c0_2 = arith.constant 0 : index
    %1 = vector.load %arg1[%c0_1, %c0_2] : memref<16x128xbf16, #tpu.memory_space<vmem>>, vector<16x128xbf16>
    %cst = arith.constant dense<0.000000e+00> : vector<8x128xf32>
    %2 = tpu.matmul %0, %1, %cst {dimension_numbers = #tpu.dot_dimension_numbers<[1], [0], [0], [1], [0, 0, 1, 1], [], []>} : vector<8x16xbf16>, vector<16x128xbf16>, vector<8x128xf32> -> vector<8x128xf32>
    %c0_3 = arith.constant 0 : index
    %c0_4 = arith.constant 0 : index
    %3 = vector.load %arg3[%c0_3, %c0_4] : memref<1x128xf32, #tpu.memory_space<vmem>>, vector<1x128xf32>
    %4 = vector.broadcast %3 : vector<1x128xf32> to vector<8x128xf32>
    %5 = arith.addf %2, %4 : vector<8x128xf32>
    %c0_5 = arith.constant 0 : index
    %c0_6 = arith.constant 0 : index
    %6 = vector.load %arg7[%c0_5, %c0_6] : memref<8x128xf32, #tpu.memory_space<vmem>>, vector<8x128xf32>
    tpu.vector_store %arg7[%c0_5, %c0_6], %5 {strides = array<i32>} : memref<8x128xf32, #tpu.memory_space<vmem>>, vector<8x128xf32>,
    %7 = tpu.iota {dimensions = array<i32: 1>} : vector<1x128xi32>
    %c64_i32 = arith.constant 64 : i32
    %8 = vector.broadcast %c64_i32 : i32 to vector<1x128xi32>
    %9 = arith.cmpi sge, %7, %8 : vector<1x128xi32>
    %c96_i32 = arith.constant 96 : i32
    %10 = vector.broadcast %c96_i32 : i32 to vector<1x128xi32>
    %11 = arith.cmpi slt, %7, %10 : vector<1x128xi32>
    %12 = arith.andi %9, %11 : vector<1x128xi1>
    %cst_7 = arith.constant 0.000000e+00 : f32
    %13 = vector.broadcast %cst_7 : f32 to vector<1x32xf32>
    %cst_8 = arith.constant 0.000000e+00 : f32
    %14 = vector.broadcast %cst_8 : f32 to vector<1x32xf32>
    %c0_i32 = arith.constant 0 : i32
    %15 = arith.index_cast %c0_i32 : i32 to index
    %c0_9 = arith.constant 0 : index
    %16 = vector.load %arg7[%15, %c0_9] : memref<8x128xf32, #tpu.memory_space<vmem>>, vector<1x128xf32>
    %17 = arith.truncf %13 : vector<1x32xf32> to vector<1x32xbf16>
    %c0_10 = arith.constant 0 : index
    %c0_11 = arith.constant 0 : index
    %18 = vector.load %arg2[%c0_10, %c0_11] : memref<32x128xbf16, #tpu.memory_space<vmem>>, vector<32x128xbf16>
    %cst_12 = arith.constant dense<0.000000e+00> : vector<1x128xf32>
    %19 = tpu.matmul %17, %18, %cst_12 {dimension_numbers = #tpu.dot_dimension_numbers<[1], [0], [0], [1], [0, 0, 1, 1], [], []>} : vector<1x32xbf16>, vector<32x128xbf16>, vector<1x128xf32> -> vector<1x128xf32>
    %20 = arith.addf %16, %19 : vector<1x128xf32>
    %21 = arith.negf %20 : vector<1x128xf32>
    %22 = math.exp %21 : vector<1x128xf32>
    %cst_13 = arith.constant 1.000000e+00 : f32
    %23 = vector.broadcast %cst_13 : f32 to vector<1x128xf32>
    %24 = arith.addf %23, %22 : vector<1x128xf32>
    %25 = arith.divf %23, %24 : vector<1x128xf32>
    %cst_14 = arith.constant 2.000000e+00 : f32
    %26 = vector.broadcast %cst_14 : f32 to vector<1x128xf32>
    %27 = arith.mulf %26, %25 : vector<1x128xf32>
    %cst_15 = arith.constant 1.000000e+00 : f32
    %28 = vector.broadcast %cst_15 : f32 to vector<1x128xf32>
    %29 = arith.subf %27, %28 : vector<1x128xf32>
    %30 = arith.select %12, %29, %25 : vector<1x128xi1>, vector<1x128xf32>
    %31 = vector.extract_strided_slice %30 {offsets = [0, 0], sizes = [1, 32], strides = [1, 1]} : vector<1x128xf32> to vector<1x32xf32>
    %32 = vector.extract_strided_slice %30 {offsets = [0, 32], sizes = [1, 32], strides = [1, 1]} : vector<1x128xf32> to vector<1x32xf32>
    %33 = vector.extract_strided_slice %30 {offsets = [0, 64], sizes = [1, 32], strides = [1, 1]} : vector<1x128xf32> to vector<1x32xf32>
    %34 = vector.extract_strided_slice %30 {offsets = [0, 96], sizes = [1, 32], strides = [1, 1]} : vector<1x128xf32> to vector<1x32xf32>
    %35 = arith.mulf %32, %14 : vector<1x32xf32>
    %36 = arith.mulf %31, %33 : vector<1x32xf32>
    %37 = arith.addf %35, %36 : vector<1x32xf32>
    %38 = math.tanh %37 : vector<1x32xf32>
    %39 = arith.mulf %34, %38 : vector<1x32xf32>
    %c1_i32 = arith.constant 1 : i32
    %40 = arith.index_cast %c1_i32 : i32 to index
    %c0_16 = arith.constant 0 : index
    %41 = vector.load %arg7[%40, %c0_16] : memref<8x128xf32, #tpu.memory_space<vmem>>, vector<1x128xf32>
    %42 = arith.truncf %39 : vector<1x32xf32> to vector<1x32xbf16>
    %c0_17 = arith.constant 0 : index
    %c0_18 = arith.constant 0 : index
    %43 = vector.load %arg2[%c0_17, %c0_18] : memref<32x128xbf16, #tpu.memory_space<vmem>>, vector<32x128xbf16>
    %cst_19 = arith.constant dense<0.000000e+00> : vector<1x128xf32>
    %44 = tpu.matmul %42, %43, %cst_19 {dimension_numbers = #tpu.dot_dimension_numbers<[1], [0], [0], [1], [0, 0, 1, 1], [], []>} : vector<1x32xbf16>, vector<32x128xbf16>, vector<1x128xf32> -> vector<1x128xf32>
    %45 = arith.addf %41, %44 : vector<1x128xf32>
    %46 = arith.negf %45 : vector<1x128xf32>
    %47 = math.exp %46 : vector<1x128xf32>
    %cst_20 = arith.constant 1.000000e+00 : f32
    %48 = vector.broadcast %cst_20 : f32 to vector<1x128xf32>
    %49 = arith.addf %48, %47 : vector<1x128xf32>
    %50 = arith.divf %48, %49 : vector<1x128xf32>
    %cst_21 = arith.constant 2.000000e+00 : f32
    %51 = vector.broadcast %cst_21 : f32 to vector<1x128xf32>
    %52 = arith.mulf %51, %50 : vector<1x128xf32>
    %cst_22 = arith.constant 1.000000e+00 : f32
    %53 = vector.broadcast %cst_22 : f32 to vector<1x128xf32>
    %54 = arith.subf %52, %53 : vector<1x128xf32>
    %55 = arith.select %12, %54, %50 : vector<1x128xi1>, vector<1x128xf32>
    %56 = vector.extract_strided_slice %55 {offsets = [0, 0], sizes = [1, 32], strides = [1, 1]} : vector<1x128xf32> to vector<1x32xf32>
    %57 = vector.extract_strided_slice %55 {offsets = [0, 32], sizes = [1, 32], strides = [1, 1]} : vector<1x128xf32> to vector<1x32xf32>
    %58 = vector.extract_strided_slice %55 {offsets = [0, 64], sizes = [1, 32], strides = [1, 1]} : vector<1x128xf32> to vector<1x32xf32>
    %59 = vector.extract_strided_slice %55 {offsets = [0, 96], sizes = [1, 32], strides = [1, 1]} : vector<1x128xf32> to vector<1x32xf32>
    %60 = arith.mulf %57, %37 : vector<1x32xf32>
    %61 = arith.mulf %56, %58 : vector<1x32xf32>
    %62 = arith.addf %60, %61 : vector<1x32xf32>
    %63 = math.tanh %62 : vector<1x32xf32>
    %64 = arith.mulf %59, %63 : vector<1x32xf32>
    %c2_i32 = arith.constant 2 : i32
    %65 = arith.index_cast %c2_i32 : i32 to index
    %c0_23 = arith.constant 0 : index
    %66 = vector.load %arg7[%65, %c0_23] : memref<8x128xf32, #tpu.memory_space<vmem>>, vector<1x128xf32>
    %67 = arith.truncf %64 : vector<1x32xf32> to vector<1x32xbf16>
    %c0_24 = arith.constant 0 : index
    %c0_25 = arith.constant 0 : index
    %68 = vector.load %arg2[%c0_24, %c0_25] : memref<32x128xbf16, #tpu.memory_space<vmem>>, vector<32x128xbf16>
    %cst_26 = arith.constant dense<0.000000e+00> : vector<1x128xf32>
    %69 = tpu.matmul %67, %68, %cst_26 {dimension_numbers = #tpu.dot_dimension_numbers<[1], [0], [0], [1], [0, 0, 1, 1], [], []>} : vector<1x32xbf16>, vector<32x128xbf16>, vector<1x128xf32> -> vector<1x128xf32>
    %70 = arith.addf %66, %69 : vector<1x128xf32>
    %71 = arith.negf %70 : vector<1x128xf32>
    %72 = math.exp %71 : vector<1x128xf32>
    %cst_27 = arith.constant 1.000000e+00 : f32
    %73 = vector.broadcast %cst_27 : f32 to vector<1x128xf32>
    %74 = arith.addf %73, %72 : vector<1x128xf32>
    %75 = arith.divf %73, %74 : vector<1x128xf32>
    %cst_28 = arith.constant 2.000000e+00 : f32
    %76 = vector.broadcast %cst_28 : f32 to vector<1x128xf32>
    %77 = arith.mulf %76, %75 : vector<1x128xf32>
    %cst_29 = arith.constant 1.000000e+00 : f32
    %78 = vector.broadcast %cst_29 : f32 to vector<1x128xf32>
    %79 = arith.subf %77, %78 : vector<1x128xf32>
    %80 = arith.select %12, %79, %75 : vector<1x128xi1>, vector<1x128xf32>
    %81 = vector.extract_strided_slice %80 {offsets = [0, 0], sizes = [1, 32], strides = [1, 1]} : vector<1x128xf32> to vector<1x32xf32>
    %82 = vector.extract_strided_slice %80 {offsets = [0, 32], sizes = [1, 32], strides = [1, 1]} : vector<1x128xf32> to vector<1x32xf32>
    %83 = vector.extract_strided_slice %80 {offsets = [0, 64], sizes = [1, 32], strides = [1, 1]} : vector<1x128xf32> to vector<1x32xf32>
    %84 = vector.extract_strided_slice %80 {offsets = [0, 96], sizes = [1, 32], strides = [1, 1]} : vector<1x128xf32> to vector<1x32xf32>
    %85 = arith.mulf %82, %62 : vector<1x32xf32>
    %86 = arith.mulf %81, %83 : vector<1x32xf32>
    %87 = arith.addf %85, %86 : vector<1x32xf32>
    %88 = math.tanh %87 : vector<1x32xf32>
    %89 = arith.mulf %84, %88 : vector<1x32xf32>
    %c3_i32 = arith.constant 3 : i32
    %90 = arith.index_cast %c3_i32 : i32 to index
    %c0_30 = arith.constant 0 : index
    %91 = vector.load %arg7[%90, %c0_30] : memref<8x128xf32, #tpu.memory_space<vmem>>, vector<1x128xf32>
    %92 = arith.truncf %89 : vector<1x32xf32> to vector<1x32xbf16>
    %c0_31 = arith.constant 0 : index
    %c0_32 = arith.constant 0 : index
    %93 = vector.load %arg2[%c0_31, %c0_32] : memref<32x128xbf16, #tpu.memory_space<vmem>>, vector<32x128xbf16>
    %cst_33 = arith.constant dense<0.000000e+00> : vector<1x128xf32>
    %94 = tpu.matmul %92, %93, %cst_33 {dimension_numbers = #tpu.dot_dimension_numbers<[1], [0], [0], [1], [0, 0, 1, 1], [], []>} : vector<1x32xbf16>, vector<32x128xbf16>, vector<1x128xf32> -> vector<1x128xf32>
    %95 = arith.addf %91, %94 : vector<1x128xf32>
    %96 = arith.negf %95 : vector<1x128xf32>
    %97 = math.exp %96 : vector<1x128xf32>
    %cst_34 = arith.constant 1.000000e+00 : f32
    %98 = vector.broadcast %cst_34 : f32 to vector<1x128xf32>
    %99 = arith.addf %98, %97 : vector<1x128xf32>
    %100 = arith.divf %98, %99 : vector<1x128xf32>
    %cst_35 = arith.constant 2.000000e+00 : f32
    %101 = vector.broadcast %cst_35 : f32 to vector<1x128xf32>
    %102 = arith.mulf %101, %100 : vector<1x128xf32>
    %cst_36 = arith.constant 1.000000e+00 : f32
    %103 = vector.broadcast %cst_36 : f32 to vector<1x128xf32>
    %104 = arith.subf %102, %103 : vector<1x128xf32>
    %105 = arith.select %12, %104, %100 : vector<1x128xi1>, vector<1x128xf32>
    %106 = vector.extract_strided_slice %105 {offsets = [0, 0], sizes = [1, 32], strides = [1, 1]} : vector<1x128xf32> to vector<1x32xf32>
    %107 = vector.extract_strided_slice %105 {offsets = [0, 32], sizes = [1, 32], strides = [1, 1]} : vector<1x128xf32> to vector<1x32xf32>
    %108 = vector.extract_strided_slice %105 {offsets = [0, 64], sizes = [1, 32], strides = [1, 1]} : vector<1x128xf32> to vector<1x32xf32>
    %109 = vector.extract_strided_slice %105 {offsets = [0, 96], sizes = [1, 32], strides = [1, 1]} : vector<1x128xf32> to vector<1x32xf32>
    %110 = arith.mulf %107, %87 : vector<1x32xf32>
    %111 = arith.mulf %106, %108 : vector<1x32xf32>
    %112 = arith.addf %110, %111 : vector<1x32xf32>
    %113 = math.tanh %112 : vector<1x32xf32>
    %114 = arith.mulf %109, %113 : vector<1x32xf32>
    %c4_i32 = arith.constant 4 : i32
    %115 = arith.index_cast %c4_i32 : i32 to index
    %c0_37 = arith.constant 0 : index
    %116 = vector.load %arg7[%115, %c0_37] : memref<8x128xf32, #tpu.memory_space<vmem>>, vector<1x128xf32>
    %117 = arith.truncf %114 : vector<1x32xf32> to vector<1x32xbf16>
    %c0_38 = arith.constant 0 : index
    %c0_39 = arith.constant 0 : index
    %118 = vector.load %arg2[%c0_38, %c0_39] : memref<32x128xbf16, #tpu.memory_space<vmem>>, vector<32x128xbf16>
    %cst_40 = arith.constant dense<0.000000e+00> : vector<1x128xf32>
    %119 = tpu.matmul %117, %118, %cst_40 {dimension_numbers = #tpu.dot_dimension_numbers<[1], [0], [0], [1], [0, 0, 1, 1], [], []>} : vector<1x32xbf16>, vector<32x128xbf16>, vector<1x128xf32> -> vector<1x128xf32>
    %120 = arith.addf %116, %119 : vector<1x128xf32>
    %121 = arith.negf %120 : vector<1x128xf32>
    %122 = math.exp %121 : vector<1x128xf32>
    %cst_41 = arith.constant 1.000000e+00 : f32
    %123 = vector.broadcast %cst_41 : f32 to vector<1x128xf32>
    %124 = arith.addf %123, %122 : vector<1x128xf32>
    %125 = arith.divf %123, %124 : vector<1x128xf32>
    %cst_42 = arith.constant 2.000000e+00 : f32
    %126 = vector.broadcast %cst_42 : f32 to vector<1x128xf32>
    %127 = arith.mulf %126, %125 : vector<1x128xf32>
    %cst_43 = arith.constant 1.000000e+00 : f32
    %128 = vector.broadcast %cst_43 : f32 to vector<1x128xf32>
    %129 = arith.subf %127, %128 : vector<1x128xf32>
    %130 = arith.select %12, %129, %125 : vector<1x128xi1>, vector<1x128xf32>
    %131 = vector.extract_strided_slice %130 {offsets = [0, 0], sizes = [1, 32], strides = [1, 1]} : vector<1x128xf32> to vector<1x32xf32>
    %132 = vector.extract_strided_slice %130 {offsets = [0, 32], sizes = [1, 32], strides = [1, 1]} : vector<1x128xf32> to vector<1x32xf32>
    %133 = vector.extract_strided_slice %130 {offsets = [0, 64], sizes = [1, 32], strides = [1, 1]} : vector<1x128xf32> to vector<1x32xf32>
    %134 = vector.extract_strided_slice %130 {offsets = [0, 96], sizes = [1, 32], strides = [1, 1]} : vector<1x128xf32> to vector<1x32xf32>
    %135 = arith.mulf %132, %112 : vector<1x32xf32>
    %136 = arith.mulf %131, %133 : vector<1x32xf32>
    %137 = arith.addf %135, %136 : vector<1x32xf32>
    %138 = math.tanh %137 : vector<1x32xf32>
    %139 = arith.mulf %134, %138 : vector<1x32xf32>
    %c5_i32 = arith.constant 5 : i32
    %140 = arith.index_cast %c5_i32 : i32 to index
    %c0_44 = arith.constant 0 : index
    %141 = vector.load %arg7[%140, %c0_44] : memref<8x128xf32, #tpu.memory_space<vmem>>, vector<1x128xf32>
    %142 = arith.truncf %139 : vector<1x32xf32> to vector<1x32xbf16>
    %c0_45 = arith.constant 0 : index
    %c0_46 = arith.constant 0 : index
    %143 = vector.load %arg2[%c0_45, %c0_46] : memref<32x128xbf16, #tpu.memory_space<vmem>>, vector<32x128xbf16>
    %cst_47 = arith.constant dense<0.000000e+00> : vector<1x128xf32>
    %144 = tpu.matmul %142, %143, %cst_47 {dimension_numbers = #tpu.dot_dimension_numbers<[1], [0], [0], [1], [0, 0, 1, 1], [], []>} : vector<1x32xbf16>, vector<32x128xbf16>, vector<1x128xf32> -> vector<1x128xf32>
    %145 = arith.addf %141, %144 : vector<1x128xf32>
    %146 = arith.negf %145 : vector<1x128xf32>
    %147 = math.exp %146 : vector<1x128xf32>
    %cst_48 = arith.constant 1.000000e+00 : f32
    %148 = vector.broadcast %cst_48 : f32 to vector<1x128xf32>
    %149 = arith.addf %148, %147 : vector<1x128xf32>
    %150 = arith.divf %148, %149 : vector<1x128xf32>
    %cst_49 = arith.constant 2.000000e+00 : f32
    %151 = vector.broadcast %cst_49 : f32 to vector<1x128xf32>
    %152 = arith.mulf %151, %150 : vector<1x128xf32>
    %cst_50 = arith.constant 1.000000e+00 : f32
    %153 = vector.broadcast %cst_50 : f32 to vector<1x128xf32>
    %154 = arith.subf %152, %153 : vector<1x128xf32>
    %155 = arith.select %12, %154, %150 : vector<1x128xi1>, vector<1x128xf32>
    %156 = vector.extract_strided_slice %155 {offsets = [0, 0], sizes = [1, 32], strides = [1, 1]} : vector<1x128xf32> to vector<1x32xf32>
    %157 = vector.extract_strided_slice %155 {offsets = [0, 32], sizes = [1, 32], strides = [1, 1]} : vector<1x128xf32> to vector<1x32xf32>
    %158 = vector.extract_strided_slice %155 {offsets = [0, 64], sizes = [1, 32], strides = [1, 1]} : vector<1x128xf32> to vector<1x32xf32>
    %159 = vector.extract_strided_slice %155 {offsets = [0, 96], sizes = [1, 32], strides = [1, 1]} : vector<1x128xf32> to vector<1x32xf32>
    %160 = arith.mulf %157, %137 : vector<1x32xf32>
    %161 = arith.mulf %156, %158 : vector<1x32xf32>
    %162 = arith.addf %160, %161 : vector<1x32xf32>
    %163 = math.tanh %162 : vector<1x32xf32>
    %164 = arith.mulf %159, %163 : vector<1x32xf32>
    %c6_i32 = arith.constant 6 : i32
    %165 = arith.index_cast %c6_i32 : i32 to index
    %c0_51 = arith.constant 0 : index
    %166 = vector.load %arg7[%165, %c0_51] : memref<8x128xf32, #tpu.memory_space<vmem>>, vector<1x128xf32>
    %167 = arith.truncf %164 : vector<1x32xf32> to vector<1x32xbf16>
    %c0_52 = arith.constant 0 : index
    %c0_53 = arith.constant 0 : index
    %168 = vector.load %arg2[%c0_52, %c0_53] : memref<32x128xbf16, #tpu.memory_space<vmem>>, vector<32x128xbf16>
    %cst_54 = arith.constant dense<0.000000e+00> : vector<1x128xf32>
    %169 = tpu.matmul %167, %168, %cst_54 {dimension_numbers = #tpu.dot_dimension_numbers<[1], [0], [0], [1], [0, 0, 1, 1], [], []>} : vector<1x32xbf16>, vector<32x128xbf16>, vector<1x128xf32> -> vector<1x128xf32>
    %170 = arith.addf %166, %169 : vector<1x128xf32>
    %171 = arith.negf %170 : vector<1x128xf32>
    %172 = math.exp %171 : vector<1x128xf32>
    %cst_55 = arith.constant 1.000000e+00 : f32
    %173 = vector.broadcast %cst_55 : f32 to vector<1x128xf32>
    %174 = arith.addf %173, %172 : vector<1x128xf32>
    %175 = arith.divf %173, %174 : vector<1x128xf32>
    %cst_56 = arith.constant 2.000000e+00 : f32
    %176 = vector.broadcast %cst_56 : f32 to vector<1x128xf32>
    %177 = arith.mulf %176, %175 : vector<1x128xf32>
    %cst_57 = arith.constant 1.000000e+00 : f32
    %178 = vector.broadcast %cst_57 : f32 to vector<1x128xf32>
    %179 = arith.subf %177, %178 : vector<1x128xf32>
    %180 = arith.select %12, %179, %175 : vector<1x128xi1>, vector<1x128xf32>
    %181 = vector.extract_strided_slice %180 {offsets = [0, 0], sizes = [1, 32], strides = [1, 1]} : vector<1x128xf32> to vector<1x32xf32>
    %182 = vector.extract_strided_slice %180 {offsets = [0, 32], sizes = [1, 32], strides = [1, 1]} : vector<1x128xf32> to vector<1x32xf32>
    %183 = vector.extract_strided_slice %180 {offsets = [0, 64], sizes = [1, 32], strides = [1, 1]} : vector<1x128xf32> to vector<1x32xf32>
    %184 = vector.extract_strided_slice %180 {offsets = [0, 96], sizes = [1, 32], strides = [1, 1]} : vector<1x128xf32> to vector<1x32xf32>
    %185 = arith.mulf %182, %162 : vector<1x32xf32>
    %186 = arith.mulf %181, %183 : vector<1x32xf32>
    %187 = arith.addf %185, %186 : vector<1x32xf32>
    %188 = math.tanh %187 : vector<1x32xf32>
    %189 = arith.mulf %184, %188 : vector<1x32xf32>
    %c7_i32 = arith.constant 7 : i32
    %190 = arith.index_cast %c7_i32 : i32 to index
    %c0_58 = arith.constant 0 : index
    %191 = vector.load %arg7[%190, %c0_58] : memref<8x128xf32, #tpu.memory_space<vmem>>, vector<1x128xf32>
    %192 = arith.truncf %189 : vector<1x32xf32> to vector<1x32xbf16>
    %c0_59 = arith.constant 0 : index
    %c0_60 = arith.constant 0 : index
    %193 = vector.load %arg2[%c0_59, %c0_60] : memref<32x128xbf16, #tpu.memory_space<vmem>>, vector<32x128xbf16>
    %cst_61 = arith.constant dense<0.000000e+00> : vector<1x128xf32>
    %194 = tpu.matmul %192, %193, %cst_61 {dimension_numbers = #tpu.dot_dimension_numbers<[1], [0], [0], [1], [0, 0, 1, 1], [], []>} : vector<1x32xbf16>, vector<32x128xbf16>, vector<1x128xf32> -> vector<1x128xf32>
    %195 = arith.addf %191, %194 : vector<1x128xf32>
    %196 = arith.negf %195 : vector<1x128xf32>
    %197 = math.exp %196 : vector<1x128xf32>
    %cst_62 = arith.constant 1.000000e+00 : f32
    %198 = vector.broadcast %cst_62 : f32 to vector<1x128xf32>
    %199 = arith.addf %198, %197 : vector<1x128xf32>
    %200 = arith.divf %198, %199 : vector<1x128xf32>
    %cst_63 = arith.constant 2.000000e+00 : f32
    %201 = vector.broadcast %cst_63 : f32 to vector<1x128xf32>
    %202 = arith.mulf %201, %200 : vector<1x128xf32>
    %cst_64 = arith.constant 1.000000e+00 : f32
    %203 = vector.broadcast %cst_64 : f32 to vector<1x128xf32>
    %204 = arith.subf %202, %203 : vector<1x128xf32>
    %205 = arith.select %12, %204, %200 : vector<1x128xi1>, vector<1x128xf32>
    %206 = vector.extract_strided_slice %205 {offsets = [0, 0], sizes = [1, 32], strides = [1, 1]} : vector<1x128xf32> to vector<1x32xf32>
    %207 = vector.extract_strided_slice %205 {offsets = [0, 32], sizes = [1, 32], strides = [1, 1]} : vector<1x128xf32> to vector<1x32xf32>
    %208 = vector.extract_strided_slice %205 {offsets = [0, 64], sizes = [1, 32], strides = [1, 1]} : vector<1x128xf32> to vector<1x32xf32>
    %209 = vector.extract_strided_slice %205 {offsets = [0, 96], sizes = [1, 32], strides = [1, 1]} : vector<1x128xf32> to vector<1x32xf32>
    %210 = arith.mulf %207, %187 : vector<1x32xf32>
    %211 = arith.mulf %206, %208 : vector<1x32xf32>
    %212 = arith.addf %210, %211 : vector<1x32xf32>
    %213 = math.tanh %212 : vector<1x32xf32>
    %214 = arith.mulf %209, %213 : vector<1x32xf32>
    %c8_i32 = arith.constant 8 : i32
    %215 = arith.truncf %214 : vector<1x32xf32> to vector<1x32xbf16>
    %c0_65 = arith.constant 0 : index
    %c0_66 = arith.constant 0 : index
    %216 = vector.load %arg4[%c0_65, %c0_66] : memref<32x8xbf16, #tpu.memory_space<vmem>>, vector<32x8xbf16>
    %cst_67 = arith.constant dense<0.000000e+00> : vector<1x8xf32>
    %217 = tpu.matmul %215, %216, %cst_67 {dimension_numbers = #tpu.dot_dimension_numbers<[1], [0], [0], [1], [0, 0, 1, 1], [], []>} : vector<1x32xbf16>, vector<32x8xbf16>, vector<1x8xf32> -> vector<1x8xf32>
    %c0_68 = arith.constant 0 : index
    %c0_69 = arith.constant 0 : index
    %218 = vector.load %arg5[%c0_68, %c0_69] : memref<1x8xf32, #tpu.memory_space<vmem>>, vector<1x8xf32>
    %219 = arith.addf %217, %218 : vector<1x8xf32>
    %cst_70 = arith.constant dense<0xFF800000> : vector<1xf32>
    %220 = vector.multi_reduction <maximumf>, %219, %cst_70 [1] : vector<1x8xf32> to vector<1xf32>
    %221 = vector.shape_cast %220 : vector<1xf32> to vector<1x1xf32>
    %222 = vector.broadcast %221 : vector<1x1xf32> to vector<1x8xf32>
    %223 = arith.subf %219, %222 : vector<1x8xf32>
    %224 = math.exp %223 : vector<1x8xf32>
    %cst_71 = arith.constant dense<0.000000e+00> : vector<1xf32>
    %225 = vector.multi_reduction <add>, %224, %cst_71 [1] : vector<1x8xf32> to vector<1xf32>
    %226 = vector.shape_cast %225 : vector<1xf32> to vector<1x1xf32>
    %227 = math.log %226 : vector<1x1xf32>
    %228 = vector.broadcast %227 : vector<1x1xf32> to vector<1x8xf32>
    %229 = arith.subf %223, %228 : vector<1x8xf32>
    %c0_72 = arith.constant 0 : index
    %c0_73 = arith.constant 0 : index
    %230 = vector.load %arg6[%c0_72, %c0_73] : memref<1x8xf32, #tpu.memory_space<vmem>>, vector<1x8xf32>
    tpu.vector_store %arg6[%c0_72, %c0_73], %229 {strides = array<i32>} : memref<1x8xf32, #tpu.memory_space<vmem>>, vector<1x8xf32>,
    return
  }
}

</mosaic_0001>

<llo_original>
// kernel: tpu_custom_call.1
$region0: #{tpu_custom_call.1}
  #allocation0 [shape = 'u32[]', space=smem, size = 0x4, offset = 0x4, fixed_abs, tag = 'smem constant byte address 0x4 - core index']
  #allocation1 [shape = 'u32[144,128]{1,0:T(1,128)}', space=vmem, size = 0x12000, scoped, tag = 'internal scratch']
  #allocation2 [shape = 'f32[8,128]{1,0:T(8,128)}', space=vmem, size = 0x1000, scoped, tag = 'scratch operand']
  %s0 = inlined_call_operand.hbm [shape: bf16[8,16], index: 0, kind: input, shape index: {}]
  %s1 = inlined_call_operand.vmem [shape: bf16[16,128], index: 1, kind: input, shape index: {}]
  %s2 = inlined_call_operand.vmem [shape: bf16[32,128], index: 2, kind: input, shape index: {}]
  %s3 = inlined_call_operand.vmem [shape: f32[1,128], index: 3, kind: input, shape index: {}]
  %s4 = inlined_call_operand.vmem [shape: bf16[32,8], index: 4, kind: input, shape index: {}]
  %s5 = inlined_call_operand.vmem [shape: f32[1,8], index: 5, kind: input, shape index: {}]
  %s6 = inlined_call_operand.hbm [shape: f32[1,8], index: 6, kind: output, shape index: {}]
  %s7 = sld [smem:[#allocation0]]
  $region38: #{tpu_custom_call.1} parent=0
    _
  %s9 = ssub.s32 1, %s7
  %s10 = scalar_select 0, %s9, %s7
  $region1: #{tpu_custom_call.1} parent=0
    #allocation3 [shape = 'u8[2048]{0}', space=vmem, size = 0x800, scoped, tag = 'input window, operand 0, single buffered']
    #allocation4 [shape = 's32[1]{0}', space=sflag, size = 0x4, scoped, tag = 'scoped memory for tpu_custom_call.1']
    #allocation5 [shape = 's32[1]{0}', space=sflag, size = 0x4, scoped, tag = 'scoped memory for tpu_custom_call.1']
    #allocation6 [shape = 'u8[512]{0}', space=vmem, size = 0x400, scoped, tag = 'output window, operand 0, single buffered']
    %11 = vsyncpa [#allocation4], 0
    %12 = vsyncpa [#allocation5], 0
    // Predicated region
    $region2: #{tpu_custom_call.1} parent=1 // pred_check
      _
    $region3: #{tpu_custom_call.1} parent=1 // pred_check_branch
      %14 = sbr.rel (0) target = $region5
    $region4: #{tpu_custom_call.1} parent=1 // pred_region
      %s16 = ssub.s32 64, 64
      %17 = vsyncadd [#allocation4], %s16
      %s19 = sshll.u32 [#allocation3], 4
      %s20 = int_to_ptr.vmem [resolvable:$true] %s19
      %22 = dma.hbm_to_vmem [thread:$0]  %s0, 64, %s20, [#allocation4]
    $region5: #{tpu_custom_call.1} parent=1 // pred_fallthru
      _
    // Predicated region
    $region6: #{tpu_custom_call.1} parent=1 // pred_check
      _
    $region7: #{tpu_custom_call.1} parent=1 // pred_check_branch
      %24 = sbr.rel (0) target = $region9
    $region8: #{tpu_custom_call.1} parent=1 // pred_region
      _
    $region9: #{tpu_custom_call.1} parent=1 // pred_fallthru
      _
    // Predicated region
    $region10: #{tpu_custom_call.1} parent=1 // pred_check
      _
    $region11: #{tpu_custom_call.1} parent=1 // pred_check_branch
      %26 = sbr.rel (0) target = $region13
    $region12: #{tpu_custom_call.1} parent=1 // pred_region
      _
    $region13: #{tpu_custom_call.1} parent=1 // pred_fallthru
      _
    // Predicated region
    $region14: #{tpu_custom_call.1} parent=1 // pred_check
      _
    $region15: #{tpu_custom_call.1} parent=1 // pred_check_branch
      %28 = sbr.rel (0) target = $region17
    $region16: #{tpu_custom_call.1} parent=1 // pred_region
      _
    $region17: #{tpu_custom_call.1} parent=1 // pred_fallthru
      _
    // Predicated region
    $region18: #{tpu_custom_call.1} parent=1 // pred_check
      _
    $region19: #{tpu_custom_call.1} parent=1 // pred_check_branch
      %30 = sbr.rel (0) target = $region21
    $region20: #{tpu_custom_call.1} parent=1 // pred_region
      _
    $region21: #{tpu_custom_call.1} parent=1 // pred_fallthru
      _
    // Predicated region
    $region22: #{tpu_custom_call.1} parent=1 // pred_check
      _
    $region23: #{tpu_custom_call.1} parent=1 // pred_check_branch
      %32 = sbr.rel (0) target = $region25
    $region24: #{tpu_custom_call.1} parent=1 // pred_region
      _
    $region25: #{tpu_custom_call.1} parent=1 // pred_fallthru
      _
    // Predicated region
    $region26: #{tpu_custom_call.1} parent=1 // pred_check
      _
    $region27: #{tpu_custom_call.1} parent=1 // pred_check_branch
      %34 = sbr.rel (0) target = $region29
    $region28: #{tpu_custom_call.1} parent=1 // pred_region
      %35 = dma.done [#allocation4], 64
    $region29: #{tpu_custom_call.1} parent=1 // pred_fallthru
      _
    %v37 = vld [vmem:[#allocation3] sm:$0xf]
    %v38 = vld [vmem:[%s1] sm:$0xf]
    %v39 = vld [vmem:[%s1 + $0x4] sm:$0xf]
    %v40 = vld [vmem:[%s3] sm:$0x1]
    %v42 = vlaneseq
    %v43 = vshrl.u32 %v42, 7
    %v44 = vsub.s32 0, %v43
    %v45 = vrot.slane %v40, %v44
    %v49 = vunpack.c.l.b16 %v38
    %v50 = vunpack.c.l.b16 %v39
    %v51 = vpack.c.b16 %v50, %v49
    %vm53 = vcmask 130048
    %v55 = vsel %vm53, %v37, 0
    %57 = vmatprep.subr.bf16.mxu0 0
    %58 = vmatpush1.bf16.msra.mxu0 %v51
    %59 = vmatprep.subr.bf16.mxu0 0
    %60 = vmatpush1.bf16.msra.mxu0 0
    %61 = vmatprep.subr.bf16.mxu0 0
    %62 = vmatpush1.bf16.msra.mxu0 0
    %63 = vmatprep.subr.bf16.mxu0 0
    %64 = vmatpush1.bf16.msra.mxu0 0
    %65 = vmatprep.subr.bf16.mxu0 0
    %66 = vmatpush1.bf16.msra.mxu0 0
    %67 = vmatprep.subr.bf16.mxu0 0
    %68 = vmatpush1.bf16.msra.mxu0 0
    %69 = vmatprep.subr.bf16.mxu0 0
    %70 = vmatpush1.bf16.msra.mxu0 0
    %71 = vmatprep.subr.bf16.mxu0 0
    %72 = vmatpush1.bf16.msra.mxu0 0
    %73 = vmatprep.subr.bf16.mxu0 0
    %74 = vmatpush1.bf16.msra.mxu0 0
    %75 = vmatprep.subr.bf16.mxu0 0
    %76 = vmatpush1.bf16.msra.mxu0 0
    %77 = vmatprep.subr.bf16.mxu0 0
    %78 = vmatpush1.bf16.msra.mxu0 0
    %79 = vmatprep.subr.bf16.mxu0 0
    %80 = vmatpush1.bf16.msra.mxu0 0
    %81 = vmatprep.subr.bf16.mxu0 0
    %82 = vmatpush1.bf16.msra.mxu0 0
    %83 = vmatprep.subr.bf16.mxu0 0
    %84 = vmatpush1.bf16.msra.mxu0 0
    %85 = vmatprep.subr.bf16.mxu0 0
    %86 = vmatpush1.bf16.msra.mxu0 0
    %87 = vmatprep.subr.bf16.mxu0 0
    %88 = vmatpush1.bf16.msra.mxu0 0
    %89 = vmatprep.mubr.bf16.mxu0 0
    %90 = vmatmul.mubr.bf16.gmra.mrb[0].mxu0 %v55
    %v91 = vpop.f32.mrb[0].mxu0
    %v92 = vadd.f32 %v45, %v91
    %v93 = vpop.f32.mrb[0].mxu0
    %v94 = vpop.f32.mrb[0].mxu0
    %v95 = vpop.f32.mrb[0].mxu0
    %96 = vdwg.mxu0
    %97 = vst [vmem:[#allocation2] sm:$0xff] %v92
    %v98 = vlaneseq
    %v99 = vand.u32 %v98, 127
    %vm100 = vcmp.ge.s32.totalorder %v99, 64
    %vm101 = vcmp.lt.s32.totalorder %v99, 96
    %vm102 = vmand %vm100, %vm101
    %v103 = vld [vmem:[#allocation2] sm:$0x1]
    %v104 = vld [vmem:[%s2] sm:$0xf]
    %v105 = vld [vmem:[%s2 + $0x4] sm:$0xf]
    %v106 = vld [vmem:[%s2 + $0x8] sm:$0xf]
    %v107 = vld [vmem:[%s2 + $0xc] sm:$0xf]
    %v112 = vunpack.c.l.b16 %v104
    %v113 = vunpack.c.l.b16 %v105
    %v114 = vunpack.c.l.b16 %v106
    %v115 = vunpack.c.l.b16 %v107
    %v116 = vpack.c.b16 %v113, %v112
    %v117 = vpack.c.b16 %v115, %v114
    %vm120 = vcmask 261120
    %v122 = vsel %vm120, 0, 0
    %124 = vmatprep.subr.bf16.mxu0 0
    %125 = vmatpush1.bf16.msra.mxu0 %v116
    %126 = vmatprep.subr.bf16.mxu0 0
    %127 = vmatpush1.bf16.msra.mxu0 %v117
    %128 = vmatprep.subr.bf16.mxu0 0
    %129 = vmatpush1.bf16.msra.mxu0 0
    %130 = vmatprep.subr.bf16.mxu0 0
    %131 = vmatpush1.bf16.msra.mxu0 0
    %132 = vmatprep.subr.bf16.mxu0 0
    %133 = vmatpush1.bf16.msra.mxu0 0
    %134 = vmatprep.subr.bf16.mxu0 0
    %135 = vmatpush1.bf16.msra.mxu0 0
    %136 = vmatprep.subr.bf16.mxu0 0
    %137 = vmatpush1.bf16.msra.mxu0 0
    %138 = vmatprep.subr.bf16.mxu0 0
    %139 = vmatpush1.bf16.msra.mxu0 0
    %140 = vmatprep.subr.bf16.mxu0 0
    %141 = vmatpush1.bf16.msra.mxu0 0
    %142 = vmatprep.subr.bf16.mxu0 0
    %143 = vmatpush1.bf16.msra.mxu0 0
    %144 = vmatprep.subr.bf16.mxu0 0
    %145 = vmatpush1.bf16.msra.mxu0 0
    %146 = vmatprep.subr.bf16.mxu0 0
    %147 = vmatpush1.bf16.msra.mxu0 0
    %148 = vmatprep.subr.bf16.mxu0 0
    %149 = vmatpush1.bf16.msra.mxu0 0
    %150 = vmatprep.subr.bf16.mxu0 0
    %151 = vmatpush1.bf16.msra.mxu0 0
    %152 = vmatprep.subr.bf16.mxu0 0
    %153 = vmatpush1.bf16.msra.mxu0 0
    %154 = vmatprep.subr.bf16.mxu0 0
    %155 = vmatpush1.bf16.msra.mxu0 0
    %156 = vmatprep.mubr.bf16.mxu0 0
    %157 = vmatmul.mubr.bf16.gmra.mrb[0].mxu0 %v122
    %v158 = vpop.f32.mrb[0].mxu0
    %v159 = vadd.f32 0.0, %v158
    %v160 = vpop.f32.mrb[0].mxu0
    %v161 = vpop.f32.mrb[0].mxu0
    %v162 = vpop.f32.mrb[0].mxu0
    %163 = vdwg.mxu0
    %v164 = vadd.f32 %v103, %v159
    %v165 = vxor.u32 %v164, 2147483648
    %v166 = vmul.f32 %v165, 1.442695
    %v167 = vpow.pop %v166
    %v168 = vadd.f32 %v167, 1.0
    %v169 = vrcp.pop %v168
    %v170 = vmul.f32 1.0, %v169
    %v171 = vmul.f32 %v170, 2.0
    %v172 = vsub.f32 %v171, 1.0
    %v173 = vsel %vm102, %v172, %v170
    %v174 = vmul.f32 %v173, 0.0
    %176 = vrot.lane.b32.xlu0 %v173, 64
    %v177 = vpop.permute.xlu0 %176
    %v179 = vmul.f32 %v173, %v177
    %181 = vrot.lane.b32.xlu0 %v179, 32
    %v182 = vpop.permute.xlu0 %181
    %v184 = vadd.f32 %v174, %v182
    %v185 = vtanh.pop %v184
    %187 = vrot.lane.b32.xlu0 %v185, 64
    %v188 = vpop.permute.xlu0 %187
    %v190 = vmul.f32 %v173, %v188
    %v191 = vld [vmem:[#allocation2 + $0x1] sm:$0x1]
    %v192 = vpack.c.bf16 %v190, %v190
    %194 = vrot.lane.b32.xlu0 %v192, 32
    %v195 = vpop.permute.xlu0 %194
    %v197 = vsel %vm120, %v195, 0
    %199 = vmatprep.subr.bf16.mxu0 0
    %200 = vmatpush1.bf16.msra.mxu0 %v116
    %201 = vmatprep.subr.bf16.mxu0 0
    %202 = vmatpush1.bf16.msra.mxu0 %v117
    %203 = vmatprep.subr.bf16.mxu0 0
    %204 = vmatpush1.bf16.msra.mxu0 0
    %205 = vmatprep.subr.bf16.mxu0 0
    %206 = vmatpush1.bf16.msra.mxu0 0
    %207 = vmatprep.subr.bf16.mxu0 0
    %208 = vmatpush1.bf16.msra.mxu0 0
    %209 = vmatprep.subr.bf16.mxu0 0
    %210 = vmatpush1.bf16.msra.mxu0 0
    %211 = vmatprep.subr.bf16.mxu0 0
    %212 = vmatpush1.bf16.msra.mxu0 0
    %213 = vmatprep.subr.bf16.mxu0 0
    %214 = vmatpush1.bf16.msra.mxu0 0
    %215 = vmatprep.subr.bf16.mxu0 0
    %216 = vmatpush1.bf16.msra.mxu0 0
    %217 = vmatprep.subr.bf16.mxu0 0
    %218 = vmatpush1.bf16.msra.mxu0 0
    %219 = vmatprep.subr.bf16.mxu0 0
    %220 = vmatpush1.bf16.msra.mxu0 0
    %221 = vmatprep.subr.bf16.mxu0 0
    %222 = vmatpush1.bf16.msra.mxu0 0
    %223 = vmatprep.subr.bf16.mxu0 0
    %224 = vmatpush1.bf16.msra.mxu0 0
    %225 = vmatprep.subr.bf16.mxu0 0
    %226 = vmatpush1.bf16.msra.mxu0 0
    %227 = vmatprep.subr.bf16.mxu0 0
    %228 = vmatpush1.bf16.msra.mxu0 0
    %229 = vmatprep.subr.bf16.mxu0 0
    %230 = vmatpush1.bf16.msra.mxu0 0
    %231 = vmatprep.mubr.bf16.mxu0 0
    %232 = vmatmul.mubr.bf16.gmra.mrb[0].mxu0 %v197
    %v233 = vpop.f32.mrb[0].mxu0
    %v234 = vadd.f32 0.0, %v233
    %v235 = vpop.f32.mrb[0].mxu0
    %v236 = vpop.f32.mrb[0].mxu0
    %v237 = vpop.f32.mrb[0].mxu0
    %238 = vdwg.mxu0
    %v239 = vadd.f32 %v191, %v234
    %v240 = vxor.u32 %v239, 2147483648
    %v241 = vmul.f32 %v240, 1.442695
    %v242 = vpow.pop %v241
    %v243 = vadd.f32 %v242, 1.0
    %v244 = vrcp.pop %v243
    %v245 = vmul.f32 1.0, %v244
    %v246 = vmul.f32 %v245, 2.0
    %v247 = vsub.f32 %v246, 1.0
    %v248 = vsel %vm102, %v247, %v245
    %v249 = vmul.f32 %v248, %v184
    %251 = vrot.lane.b32.xlu0 %v248, 64
    %v252 = vpop.permute.xlu0 %251
    %v254 = vmul.f32 %v248, %v252
    %256 = vrot.lane.b32.xlu0 %v254, 32
    %v257 = vpop.permute.xlu0 %256
    %v259 = vadd.f32 %v249, %v257
    %v260 = vtanh.pop %v259
    %262 = vrot.lane.b32.xlu0 %v260, 64
    %v263 = vpop.permute.xlu0 %262
    %v265 = vmul.f32 %v248, %v263
    %v266 = vld [vmem:[#allocation2 + $0x2] sm:$0x1]
    %v267 = vpack.c.bf16 %v265, %v265
    %269 = vrot.lane.b32.xlu0 %v267, 32
    %v270 = vpop.permute.xlu0 %269
    %v272 = vsel %vm120, %v270, 0
    %274 = vmatprep.subr.bf16.mxu0 0
    %275 = vmatpush1.bf16.msra.mxu0 %v116
    %276 = vmatprep.subr.bf16.mxu0 0
    %277 = vmatpush1.bf16.msra.mxu0 %v117
    %278 = vmatprep.subr.bf16.mxu0 0
    %279 = vmatpush1.bf16.msra.mxu0 0
    %280 = vmatprep.subr.bf16.mxu0 0
    %281 = vmatpush1.bf16.msra.mxu0 0
    %282 = vmatprep.subr.bf16.mxu0 0
    %283 = vmatpush1.bf16.msra.mxu0 0
    %284 = vmatprep.subr.bf16.mxu0 0
    %285 = vmatpush1.bf16.msra.mxu0 0
    %286 = vmatprep.subr.bf16.mxu0 0
    %287 = vmatpush1.bf16.msra.mxu0 0
    %288 = vmatprep.subr.bf16.mxu0 0
    %289 = vmatpush1.bf16.msra.mxu0 0
    %290 = vmatprep.subr.bf16.mxu0 0
    %291 = vmatpush1.bf16.msra.mxu0 0
    %292 = vmatprep.subr.bf16.mxu0 0
    %293 = vmatpush1.bf16.msra.mxu0 0
    %294 = vmatprep.subr.bf16.mxu0 0
    %295 = vmatpush1.bf16.msra.mxu0 0
    %296 = vmatprep.subr.bf16.mxu0 0
    %297 = vmatpush1.bf16.msra.mxu0 0
    %298 = vmatprep.subr.bf16.mxu0 0
    %299 = vmatpush1.bf16.msra.mxu0 0
    %300 = vmatprep.subr.bf16.mxu0 0
    %301 = vmatpush1.bf16.msra.mxu0 0
    %302 = vmatprep.subr.bf16.mxu0 0
    %303 = vmatpush1.bf16.msra.mxu0 0
    %304 = vmatprep.subr.bf16.mxu0 0
    %305 = vmatpush1.bf16.msra.mxu0 0
    %306 = vmatprep.mubr.bf16.mxu0 0
    %307 = vmatmul.mubr.bf16.gmra.mrb[0].mxu0 %v272
    %v308 = vpop.f32.mrb[0].mxu0
    %v309 = vadd.f32 0.0, %v308
    %v310 = vpop.f32.mrb[0].mxu0
    %v311 = vpop.f32.mrb[0].mxu0
    %v312 = vpop.f32.mrb[0].mxu0
    %313 = vdwg.mxu0
    %v314 = vadd.f32 %v266, %v309
    %v315 = vxor.u32 %v314, 2147483648
    %v316 = vmul.f32 %v315, 1.442695
    %v317 = vpow.pop %v316
    %v318 = vadd.f32 %v317, 1.0
    %v319 = vrcp.pop %v318
    %v320 = vmul.f32 1.0, %v319
    %v321 = vmul.f32 %v320, 2.0
    %v322 = vsub.f32 %v321, 1.0
    %v323 = vsel %vm102, %v322, %v320
    %v324 = vmul.f32 %v323, %v259
    %326 = vrot.lane.b32.xlu0 %v323, 64
    %v327 = vpop.permute.xlu0 %326
    %v329 = vmul.f32 %v323, %v327
    %331 = vrot.lane.b32.xlu0 %v329, 32
    %v332 = vpop.permute.xlu0 %331
    %v334 = vadd.f32 %v324, %v332
    %v335 = vtanh.pop %v334
    %337 = vrot.lane.b32.xlu0 %v335, 64
    %v338 = vpop.permute.xlu0 %337
    %v340 = vmul.f32 %v323, %v338
    %v341 = vld [vmem:[#allocation2 + $0x3] sm:$0x1]
    %v342 = vpack.c.bf16 %v340, %v340
    %344 = vrot.lane.b32.xlu0 %v342, 32
    %v345 = vpop.permute.xlu0 %344
    %v347 = vsel %vm120, %v345, 0
    %349 = vmatprep.subr.bf16.mxu0 0
    %350 = vmatpush1.bf16.msra.mxu0 %v116
    %351 = vmatprep.subr.bf16.mxu0 0
    %352 = vmatpush1.bf16.msra.mxu0 %v117
    %353 = vmatprep.subr.bf16.mxu0 0
    %354 = vmatpush1.bf16.msra.mxu0 0
    %355 = vmatprep.subr.bf16.mxu0 0
    %356 = vmatpush1.bf16.msra.mxu0 0
    %357 = vmatprep.subr.bf16.mxu0 0
    %358 = vmatpush1.bf16.msra.mxu0 0
    %359 = vmatprep.subr.bf16.mxu0 0
    %360 = vmatpush1.bf16.msra.mxu0 0
    %361 = vmatprep.subr.bf16.mxu0 0
    %362 = vmatpush1.bf16.msra.mxu0 0
    %363 = vmatprep.subr.bf16.mxu0 0
    %364 = vmatpush1.bf16.msra.mxu0 0
    %365 = vmatprep.subr.bf16.mxu0 0
    %366 = vmatpush1.bf16.msra.mxu0 0
    %367 = vmatprep.subr.bf16.mxu0 0
    %368 = vmatpush1.bf16.msra.mxu0 0
    %369 = vmatprep.subr.bf16.mxu0 0
    %370 = vmatpush1.bf16.msra.mxu0 0
    %371 = vmatprep.subr.bf16.mxu0 0
    %372 = vmatpush1.bf16.msra.mxu0 0
    %373 = vmatprep.subr.bf16.mxu0 0
    %374 = vmatpush1.bf16.msra.mxu0 0
    %375 = vmatprep.subr.bf16.mxu0 0
    %376 = vmatpush1.bf16.msra.mxu0 0
    %377 = vmatprep.subr.bf16.mxu0 0
    %378 = vmatpush1.bf16.msra.mxu0 0
    %379 = vmatprep.subr.bf16.mxu0 0
    %380 = vmatpush1.bf16.msra.mxu0 0
    %381 = vmatprep.mubr.bf16.mxu0 0
    %382 = vmatmul.mubr.bf16.gmra.mrb[0].mxu0 %v347
    %v383 = vpop.f32.mrb[0].mxu0
    %v384 = vadd.f32 0.0, %v383
    %v385 = vpop.f32.mrb[0].mxu0
    %v386 = vpop.f32.mrb[0].mxu0
    %v387 = vpop.f32.mrb[0].mxu0
    %388 = vdwg.mxu0
    %v389 = vadd.f32 %v341, %v384
    %v390 = vxor.u32 %v389, 2147483648
    %v391 = vmul.f32 %v390, 1.442695
    %v392 = vpow.pop %v391
    %v393 = vadd.f32 %v392, 1.0
    %v394 = vrcp.pop %v393
    %v395 = vmul.f32 1.0, %v394
    %v396 = vmul.f32 %v395, 2.0
    %v397 = vsub.f32 %v396, 1.0
    %v398 = vsel %vm102, %v397, %v395
    %v399 = vmul.f32 %v398, %v334
    %401 = vrot.lane.b32.xlu0 %v398, 64
    %v402 = vpop.permute.xlu0 %401
    %v404 = vmul.f32 %v398, %v402
    %406 = vrot.lane.b32.xlu0 %v404, 32
    %v407 = vpop.permute.xlu0 %406
    %v409 = vadd.f32 %v399, %v407
    %v410 = vtanh.pop %v409
    %412 = vrot.lane.b32.xlu0 %v410, 64
    %v413 = vpop.permute.xlu0 %412
    %v415 = vmul.f32 %v398, %v413
    %v416 = vld [vmem:[#allocation2 + $0x4] sm:$0x1]
    %v417 = vpack.c.bf16 %v415, %v415
    %419 = vrot.lane.b32.xlu0 %v417, 32
    %v420 = vpop.permute.xlu0 %419
    %v422 = vsel %vm120, %v420, 0
    %424 = vmatprep.subr.bf16.mxu0 0
    %425 = vmatpush1.bf16.msra.mxu0 %v116
    %426 = vmatprep.subr.bf16.mxu0 0
    %427 = vmatpush1.bf16.msra.mxu0 %v117
    %428 = vmatprep.subr.bf16.mxu0 0
    %429 = vmatpush1.bf16.msra.mxu0 0
    %430 = vmatprep.subr.bf16.mxu0 0
    %431 = vmatpush1.bf16.msra.mxu0 0
    %432 = vmatprep.subr.bf16.mxu0 0
    %433 = vmatpush1.bf16.msra.mxu0 0
    %434 = vmatprep.subr.bf16.mxu0 0
    %435 = vmatpush1.bf16.msra.mxu0 0
    %436 = vmatprep.subr.bf16.mxu0 0
    %437 = vmatpush1.bf16.msra.mxu0 0
    %438 = vmatprep.subr.bf16.mxu0 0
    %439 = vmatpush1.bf16.msra.mxu0 0
    %440 = vmatprep.subr.bf16.mxu0 0
    %441 = vmatpush1.bf16.msra.mxu0 0
    %442 = vmatprep.subr.bf16.mxu0 0
    %443 = vmatpush1.bf16.msra.mxu0 0
    %444 = vmatprep.subr.bf16.mxu0 0
    %445 = vmatpush1.bf16.msra.mxu0 0
    %446 = vmatprep.subr.bf16.mxu0 0
    %447 = vmatpush1.bf16.msra.mxu0 0
    %448 = vmatprep.subr.bf16.mxu0 0
    %449 = vmatpush1.bf16.msra.mxu0 0
    %450 = vmatprep.subr.bf16.mxu0 0
    %451 = vmatpush1.bf16.msra.mxu0 0
    %452 = vmatprep.subr.bf16.mxu0 0
    %453 = vmatpush1.bf16.msra.mxu0 0
    %454 = vmatprep.subr.bf16.mxu0 0
    %455 = vmatpush1.bf16.msra.mxu0 0
    %456 = vmatprep.mubr.bf16.mxu0 0
    %457 = vmatmul.mubr.bf16.gmra.mrb[0].mxu0 %v422
    %v458 = vpop.f32.mrb[0].mxu0
    %v459 = vadd.f32 0.0, %v458
    %v460 = vpop.f32.mrb[0].mxu0
    %v461 = vpop.f32.mrb[0].mxu0
    %v462 = vpop.f32.mrb[0].mxu0
    %463 = vdwg.mxu0
    %v464 = vadd.f32 %v416, %v459
    %v465 = vxor.u32 %v464, 2147483648
    %v466 = vmul.f32 %v465, 1.442695
    %v467 = vpow.pop %v466
    %v468 = vadd.f32 %v467, 1.0
    %v469 = vrcp.pop %v468
    %v470 = vmul.f32 1.0, %v469
    %v471 = vmul.f32 %v470, 2.0
    %v472 = vsub.f32 %v471, 1.0
    %v473 = vsel %vm102, %v472, %v470
    %v474 = vmul.f32 %v473, %v409
    %476 = vrot.lane.b32.xlu0 %v473, 64
    %v477 = vpop.permute.xlu0 %476
    %v479 = vmul.f32 %v473, %v477
    %481 = vrot.lane.b32.xlu0 %v479, 32
    %v482 = vpop.permute.xlu0 %481
    %v484 = vadd.f32 %v474, %v482
    %v485 = vtanh.pop %v484
    %487 = vrot.lane.b32.xlu0 %v485, 64
    %v488 = vpop.permute.xlu0 %487
    %v490 = vmul.f32 %v473, %v488
    %v491 = vld [vmem:[#allocation2 + $0x5] sm:$0x1]
    %v492 = vpack.c.bf16 %v490, %v490
    %494 = vrot.lane.b32.xlu0 %v492, 32
    %v495 = vpop.permute.xlu0 %494
    %v497 = vsel %vm120, %v495, 0
    %499 = vmatprep.subr.bf16.mxu0 0
    %500 = vmatpush1.bf16.msra.mxu0 %v116
    %501 = vmatprep.subr.bf16.mxu0 0
    %502 = vmatpush1.bf16.msra.mxu0 %v117
    %503 = vmatprep.subr.bf16.mxu0 0
    %504 = vmatpush1.bf16.msra.mxu0 0
    %505 = vmatprep.subr.bf16.mxu0 0
    %506 = vmatpush1.bf16.msra.mxu0 0
    %507 = vmatprep.subr.bf16.mxu0 0
    %508 = vmatpush1.bf16.msra.mxu0 0
    %509 = vmatprep.subr.bf16.mxu0 0
    %510 = vmatpush1.bf16.msra.mxu0 0
    %511 = vmatprep.subr.bf16.mxu0 0
    %512 = vmatpush1.bf16.msra.mxu0 0
    %513 = vmatprep.subr.bf16.mxu0 0
    %514 = vmatpush1.bf16.msra.mxu0 0
    %515 = vmatprep.subr.bf16.mxu0 0
    %516 = vmatpush1.bf16.msra.mxu0 0
    %517 = vmatprep.subr.bf16.mxu0 0
    %518 = vmatpush1.bf16.msra.mxu0 0
    %519 = vmatprep.subr.bf16.mxu0 0
    %520 = vmatpush1.bf16.msra.mxu0 0
    %521 = vmatprep.subr.bf16.mxu0 0
    %522 = vmatpush1.bf16.msra.mxu0 0
    %523 = vmatprep.subr.bf16.mxu0 0
    %524 = vmatpush1.bf16.msra.mxu0 0
    %525 = vmatprep.subr.bf16.mxu0 0
    %526 = vmatpush1.bf16.msra.mxu0 0
    %527 = vmatprep.subr.bf16.mxu0 0
    %528 = vmatpush1.bf16.msra.mxu0 0
    %529 = vmatprep.subr.bf16.mxu0 0
    %530 = vmatpush1.bf16.msra.mxu0 0
    %531 = vmatprep.mubr.bf16.mxu0 0
    %532 = vmatmul.mubr.bf16.gmra.mrb[0].mxu0 %v497
    %v533 = vpop.f32.mrb[0].mxu0
    %v534 = vadd.f32 0.0, %v533
    %v535 = vpop.f32.mrb[0].mxu0
    %v536 = vpop.f32.mrb[0].mxu0
    %v537 = vpop.f32.mrb[0].mxu0
    %538 = vdwg.mxu0
    %v539 = vadd.f32 %v491, %v534
    %v540 = vxor.u32 %v539, 2147483648
    %v541 = vmul.f32 %v540, 1.442695
    %v542 = vpow.pop %v541
    %v543 = vadd.f32 %v542, 1.0
    %v544 = vrcp.pop %v543
    %v545 = vmul.f32 1.0, %v544
    %v546 = vmul.f32 %v545, 2.0
    %v547 = vsub.f32 %v546, 1.0
    %v548 = vsel %vm102, %v547, %v545
    %v549 = vmul.f32 %v548, %v484
    %551 = vrot.lane.b32.xlu0 %v548, 64
    %v552 = vpop.permute.xlu0 %551
    %v554 = vmul.f32 %v548, %v552
    %556 = vrot.lane.b32.xlu0 %v554, 32
    %v557 = vpop.permute.xlu0 %556
    %v559 = vadd.f32 %v549, %v557
    %v560 = vtanh.pop %v559
    %562 = vrot.lane.b32.xlu0 %v560, 64
    %v563 = vpop.permute.xlu0 %562
    %v565 = vmul.f32 %v548, %v563
    %v566 = vld [vmem:[#allocation2 + $0x6] sm:$0x1]
    %v567 = vpack.c.bf16 %v565, %v565
    %569 = vrot.lane.b32.xlu0 %v567, 32
    %v570 = vpop.permute.xlu0 %569
    %v572 = vsel %vm120, %v570, 0
    %574 = vmatprep.subr.bf16.mxu0 0
    %575 = vmatpush1.bf16.msra.mxu0 %v116
    %576 = vmatprep.subr.bf16.mxu0 0
    %577 = vmatpush1.bf16.msra.mxu0 %v117
    %578 = vmatprep.subr.bf16.mxu0 0
    %579 = vmatpush1.bf16.msra.mxu0 0
    %580 = vmatprep.subr.bf16.mxu0 0
    %581 = vmatpush1.bf16.msra.mxu0 0
    %582 = vmatprep.subr.bf16.mxu0 0
    %583 = vmatpush1.bf16.msra.mxu0 0
    %584 = vmatprep.subr.bf16.mxu0 0
    %585 = vmatpush1.bf16.msra.mxu0 0
    %586 = vmatprep.subr.bf16.mxu0 0
    %587 = vmatpush1.bf16.msra.mxu0 0
    %588 = vmatprep.subr.bf16.mxu0 0
    %589 = vmatpush1.bf16.msra.mxu0 0
    %590 = vmatprep.subr.bf16.mxu0 0
    %591 = vmatpush1.bf16.msra.mxu0 0
    %592 = vmatprep.subr.bf16.mxu0 0
    %593 = vmatpush1.bf16.msra.mxu0 0
    %594 = vmatprep.subr.bf16.mxu0 0
    %595 = vmatpush1.bf16.msra.mxu0 0
    %596 = vmatprep.subr.bf16.mxu0 0
    %597 = vmatpush1.bf16.msra.mxu0 0
    %598 = vmatprep.subr.bf16.mxu0 0
    %599 = vmatpush1.bf16.msra.mxu0 0
    %600 = vmatprep.subr.bf16.mxu0 0
    %601 = vmatpush1.bf16.msra.mxu0 0
    %602 = vmatprep.subr.bf16.mxu0 0
    %603 = vmatpush1.bf16.msra.mxu0 0
    %604 = vmatprep.subr.bf16.mxu0 0
    %605 = vmatpush1.bf16.msra.mxu0 0
    %606 = vmatprep.mubr.bf16.mxu0 0
    %607 = vmatmul.mubr.bf16.gmra.mrb[0].mxu0 %v572
    %v608 = vpop.f32.mrb[0].mxu0
    %v609 = vadd.f32 0.0, %v608
    %v610 = vpop.f32.mrb[0].mxu0
    %v611 = vpop.f32.mrb[0].mxu0
    %v612 = vpop.f32.mrb[0].mxu0
    %613 = vdwg.mxu0
    %v614 = vadd.f32 %v566, %v609
    %v615 = vxor.u32 %v614, 2147483648
    %v616 = vmul.f32 %v615, 1.442695
    %v617 = vpow.pop %v616
    %v618 = vadd.f32 %v617, 1.0
    %v619 = vrcp.pop %v618
    %v620 = vmul.f32 1.0, %v619
    %v621 = vmul.f32 %v620, 2.0
    %v622 = vsub.f32 %v621, 1.0
    %v623 = vsel %vm102, %v622, %v620
    %v624 = vmul.f32 %v623, %v559
    %626 = vrot.lane.b32.xlu0 %v623, 64
    %v627 = vpop.permute.xlu0 %626
    %v629 = vmul.f32 %v623, %v627
    %631 = vrot.lane.b32.xlu0 %v629, 32
    %v632 = vpop.permute.xlu0 %631
    %v634 = vadd.f32 %v624, %v632
    %v635 = vtanh.pop %v634
    %637 = vrot.lane.b32.xlu0 %v635, 64
    %v638 = vpop.permute.xlu0 %637
    %v640 = vmul.f32 %v623, %v638
    %v641 = vld [vmem:[#allocation2 + $0x7] sm:$0x1]
    %v642 = vpack.c.bf16 %v640, %v640
    %644 = vrot.lane.b32.xlu0 %v642, 32
    %v645 = vpop.permute.xlu0 %644
    %v647 = vsel %vm120, %v645, 0
    %649 = vmatprep.subr.bf16.mxu0 0
    %650 = vmatpush1.bf16.msra.mxu0 %v116
    %651 = vmatprep.subr.bf16.mxu0 0
    %652 = vmatpush1.bf16.msra.mxu0 %v117
    %653 = vmatprep.subr.bf16.mxu0 0
    %654 = vmatpush1.bf16.msra.mxu0 0
    %655 = vmatprep.subr.bf16.mxu0 0
    %656 = vmatpush1.bf16.msra.mxu0 0
    %657 = vmatprep.subr.bf16.mxu0 0
    %658 = vmatpush1.bf16.msra.mxu0 0
    %659 = vmatprep.subr.bf16.mxu0 0
    %660 = vmatpush1.bf16.msra.mxu0 0
    %661 = vmatprep.subr.bf16.mxu0 0
    %662 = vmatpush1.bf16.msra.mxu0 0
    %663 = vmatprep.subr.bf16.mxu0 0
    %664 = vmatpush1.bf16.msra.mxu0 0
    %665 = vmatprep.subr.bf16.mxu0 0
    %666 = vmatpush1.bf16.msra.mxu0 0
    %667 = vmatprep.subr.bf16.mxu0 0
    %668 = vmatpush1.bf16.msra.mxu0 0
    %669 = vmatprep.subr.bf16.mxu0 0
    %670 = vmatpush1.bf16.msra.mxu0 0
    %671 = vmatprep.subr.bf16.mxu0 0
    %672 = vmatpush1.bf16.msra.mxu0 0
    %673 = vmatprep.subr.bf16.mxu0 0
    %674 = vmatpush1.bf16.msra.mxu0 0
    %675 = vmatprep.subr.bf16.mxu0 0
    %676 = vmatpush1.bf16.msra.mxu0 0
    %677 = vmatprep.subr.bf16.mxu0 0
    %678 = vmatpush1.bf16.msra.mxu0 0
    %679 = vmatprep.subr.bf16.mxu0 0
    %680 = vmatpush1.bf16.msra.mxu0 0
    %681 = vmatprep.mubr.bf16.mxu0 0
    %682 = vmatmul.mubr.bf16.gmra.mrb[0].mxu0 %v647
    %v683 = vpop.f32.mrb[0].mxu0
    %v684 = vadd.f32 0.0, %v683
    %v685 = vpop.f32.mrb[0].mxu0
    %v686 = vpop.f32.mrb[0].mxu0
    %v687 = vpop.f32.mrb[0].mxu0
    %688 = vdwg.mxu0
    %v689 = vadd.f32 %v641, %v684
    %v690 = vxor.u32 %v689, 2147483648
    %v691 = vmul.f32 %v690, 1.442695
    %v692 = vpow.pop %v691
    %v693 = vadd.f32 %v692, 1.0
    %v694 = vrcp.pop %v693
    %v695 = vmul.f32 1.0, %v694
    %v696 = vmul.f32 %v695, 2.0
    %v697 = vsub.f32 %v696, 1.0
    %v698 = vsel %vm102, %v697, %v695
    %v699 = vmul.f32 %v698, %v634
    %701 = vrot.lane.b32.xlu0 %v698, 64
    %v702 = vpop.permute.xlu0 %701
    %v704 = vmul.f32 %v698, %v702
    %706 = vrot.lane.b32.xlu0 %v704, 32
    %v707 = vpop.permute.xlu0 %706
    %v709 = vadd.f32 %v699, %v707
    %v710 = vtanh.pop %v709
    %712 = vrot.lane.b32.xlu0 %v710, 64
    %v713 = vpop.permute.xlu0 %712
    %v715 = vmul.f32 %v698, %v713
    %v716 = vpack.c.bf16 %v715, %v715
    %v717 = vld [vmem:[%s4] sm:$0xf]
    %v718 = vld [vmem:[%s4 + $0x4] sm:$0xf]
    %v719 = vld [vmem:[%s4 + $0x8] sm:$0xf]
    %v720 = vld [vmem:[%s4 + $0xc] sm:$0xf]
    %v721 = vld [vmem:[%s5] sm:$0x1]
    %723 = vrot.lane.b32.xlu0 %v716, 32
    %v724 = vpop.permute.xlu0 %723
    %v729 = vunpack.c.l.b16 %v717
    %v730 = vunpack.c.l.b16 %v718
    %v731 = vunpack.c.l.b16 %v719
    %v732 = vunpack.c.l.b16 %v720
    %v733 = vpack.c.b16 %v730, %v729
    %v734 = vpack.c.b16 %v732, %v731
    %v738 = vsel %vm120, %v724, 0
    %740 = vmatprep.subr.bf16.mxu0 0
    %741 = vmatpush1.bf16.msra.mxu0 %v733
    %742 = vmatprep.subr.bf16.mxu0 0
    %743 = vmatpush1.bf16.msra.mxu0 %v734
    %744 = vmatprep.subr.bf16.mxu0 0
    %745 = vmatpush1.bf16.msra.mxu0 0
    %746 = vmatprep.subr.bf16.mxu0 0
    %747 = vmatpush1.bf16.msra.mxu0 0
    %748 = vmatprep.subr.bf16.mxu0 0
    %749 = vmatpush1.bf16.msra.mxu0 0
    %750 = vmatprep.subr.bf16.mxu0 0
    %751 = vmatpush1.bf16.msra.mxu0 0
    %752 = vmatprep.subr.bf16.mxu0 0
    %753 = vmatpush1.bf16.msra.mxu0 0
    %754 = vmatprep.subr.bf16.mxu0 0
    %755 = vmatpush1.bf16.msra.mxu0 0
    %756 = vmatprep.subr.bf16.mxu0 0
    %757 = vmatpush1.bf16.msra.mxu0 0
    %758 = vmatprep.subr.bf16.mxu0 0
    %759 = vmatpush1.bf16.msra.mxu0 0
    %760 = vmatprep.subr.bf16.mxu0 0
    %761 = vmatpush1.bf16.msra.mxu0 0
    %762 = vmatprep.subr.bf16.mxu0 0
    %763 = vmatpush1.bf16.msra.mxu0 0
    %764 = vmatprep.subr.bf16.mxu0 0
    %765 = vmatpush1.bf16.msra.mxu0 0
    %766 = vmatprep.subr.bf16.mxu0 0
    %767 = vmatpush1.bf16.msra.mxu0 0
    %768 = vmatprep.subr.bf16.mxu0 0
    %769 = vmatpush1.bf16.msra.mxu0 0
    %770 = vmatprep.subr.bf16.mxu0 0
    %771 = vmatpush1.bf16.msra.mxu0 0
    %772 = vmatprep.mubr.bf16.mxu0 0
    %773 = vmatmul.mubr.bf16.gmra.mrb[0].mxu0 %v738
    %v774 = vpop.f32.mrb[0].mxu0
    %v775 = vadd.f32 %v721, %v774
    %v776 = vpop.f32.mrb[0].mxu0
    %v777 = vpop.f32.mrb[0].mxu0
    %v778 = vpop.f32.mrb[0].mxu0
    %779 = vdwg.mxu0
    %vm780 = vcmask 57344
    %v781 = vsel %vm780, %v775, -inf
    %782 = vmax.xlane.f32.xlu0 %v781
    %v783 = vpop.xlane.xlu0 %782
    %v784 = vsub.f32 %v775, %v783
    %v785 = vmul.f32 %v784, 1.442695
    %v786 = vpow.pop %v785
    %v787 = vsel %vm780, %v786, 0.0
    %788 = vadd.xlane.f32.xlu0 %v787
    %v789 = vpop.xlane.xlu0 %788
    %v790 = vlog2.pop %v789
    %v791 = vmul.f32 %v790, 0.6931472
    %v792 = vsub.f32 %v784, %v791
    %793 = vst.msk [vmem:[#allocation6] sm:$0x1] %vm780, %v792
    // Predicated region
    $region30: #{tpu_custom_call.1} parent=1 // pred_check
      _
    $region31: #{tpu_custom_call.1} parent=1 // pred_check_branch
      %795 = sbr.rel (0) target = $region33
    $region32: #{tpu_custom_call.1} parent=1 // pred_region
      %s797 = ssub.s32 16, 16
      %798 = vsyncadd [#allocation5], %s797
      %s800 = sshll.u32 [#allocation6], 4
      %s801 = int_to_ptr.vmem [resolvable:$true] %s800
      %803 = dma.vmem_to_hbm [thread:$0]  %s801, 16, %s6, [#allocation5]
    $region33: #{tpu_custom_call.1} parent=1 // pred_fallthru
      _
    // Predicated region
    $region34: #{tpu_custom_call.1} parent=1 // pred_check
      _
    $region35: #{tpu_custom_call.1} parent=1 // pred_check_branch
      %805 = sbr.rel (0) target = $region37
    $region36: #{tpu_custom_call.1} parent=1 // pred_region
      %806 = dma.done [#allocation5], 16
    $region37: #{tpu_custom_call.1} parent=1 // pred_fallthru
      _
    %807 = vsyncpa [#allocation4], 1
    %808 = vsyncpa [#allocation5], 1

</llo_original>
